<compile_context>
chip_gen: v6e
topology: v6e:2x2x1
jax: 0.10.0
libtpu: 0.0.40
codegen_flags: <defaults>
</compile_context>

<pallas_src>
import functools

import jax
import jax.numpy as jnp
from jax.experimental import pallas as pl
from jax.experimental.pallas import tpu as pltpu

ACTIVE_NEURONS_COUNT = 8   # the module's global `k`
TAU = 0.1
NUM_CLASSES = 5
B_PAD = 8                  # batch rows padded to one sublane tile
NC_PAD = 128               # classifier lane padding (num_classes -> 128)
SUBLANES = 8               # rows of the sublane-dense top-k working layout


def _sae_kernel(x_ref, l2_ref, g2_ref, l1_ref, g1_ref, w_hbm_ref, b_ref,
                mask_ref, out_ref, w_vmem, w_sem, *, k, tau):
    """Gumbel top-k hard mask + masked classifier head, single invocation."""
    # Kick off the classifier-weight DMA immediately so it overlaps with the
    # serial top-k chain; wait only right before the matmul.
    w_copy = pltpu.make_async_copy(w_hbm_ref, w_vmem, w_sem)
    w_copy.start()

    inv_tau = 1.0 / tau

    # --- scores in the sublane-dense (8, N//8) layout ------------------------
    scores2 = (l2_ref[...] + g2_ref[...]) * inv_tau

    # --- serial top-k: one XLU max + one VPU select per iteration ------------
    # After the loop `thr` is the k-th largest score.
    work = scores2
    thr = jnp.max(work)
    for _ in range(k - 1):                           # k small & static
        work = jnp.where(work == thr, -jnp.inf, work)
        thr = jnp.max(work)

    # --- hard mask in lane-major (1, N) layout for the classifier path -------
    # Same per-element IEEE ops as scores2, so the threshold compare selects
    # exactly the same k elements in this layout.
    scores1 = (l1_ref[...] + g1_ref[...]) * inv_tau
    hard1 = (scores1 >= thr).astype(jnp.float32)     # exactly k ones
    mask_ref[...] = hard1
    # TODO(synk): straight-through (hard - softmax).detach() + softmax term
    # omitted -- forward value equals `hard1`; only relevant for backward.

    # --- apply mask and run the classifier head on the MXU -------------------
    masked = x_ref[...] * hard1                      # [B_PAD, N]
    w_copy.wait()
    out_ref[...] = (
        jnp.dot(masked, w_vmem[...], preferred_element_type=jnp.float32)
        + b_ref[...]
    )


def prepare_head_params(w_head, b_head, num_classes=NUM_CLASSES):
    """One-time prep of the mlp_head params: transpose + lane-pad to NC_PAD."""
    n = w_head.shape[1]
    w_pad = jnp.zeros((n, NC_PAD), jnp.float32).at[:, :num_classes].set(
        w_head.T.astype(jnp.float32))
    b_pad = jnp.zeros((1, NC_PAD), jnp.float32).at[0, :num_classes].set(
        b_head.astype(jnp.float32))
    return w_pad, b_pad


def sparse_autoencoder_conv_forward(x, mask_logits, w_pad, b_pad, gumbel,
                                    k=ACTIVE_NEURONS_COUNT, tau=TAU,
                                    num_classes=NUM_CLASSES):
    """Returns (binary_mask [B,C,H,W], logits [B,num_classes]) like the torch module."""
    B, C, H, W = x.shape
    N = C * H * W
    assert k >= 1
    assert B <= B_PAD, "increase B_PAD for larger batches"
    assert N % (SUBLANES * 128) == 0, "N = C*H*W must be a multiple of 1024"

    x_flat = x.reshape(B, N).astype(jnp.float32)
    x_pad = jnp.zeros((B_PAD, N), jnp.float32).at[:B].set(x_flat)
    logit1 = mask_logits.reshape(1, N).astype(jnp.float32)
    gum1 = gumbel.reshape(1, N).astype(jnp.float32)
    # Row-major reshape preserves flat order: element (r, c) == flat[r*(N//8)+c].
    logit2 = logit1.reshape(SUBLANES, N // SUBLANES)
    gum2 = gum1.reshape(SUBLANES, N // SUBLANES)

    kernel = functools.partial(_sae_kernel, k=k, tau=tau)
    vmem = pltpu.MemorySpace.VMEM

    mask_flat, logits_pad = pl.pallas_call(
        kernel,
        out_shape=(jax.ShapeDtypeStruct((1, N), jnp.float32),
                   jax.ShapeDtypeStruct((B_PAD, NC_PAD), jnp.float32)),
        in_specs=[
            pl.BlockSpec(memory_space=vmem),     # x_pad           [B_PAD, N]
            pl.BlockSpec(memory_space=vmem),     # logits          (8, N//8)
            pl.BlockSpec(memory_space=vmem),     # gumbel          (8, N//8)
            pl.BlockSpec(memory_space=vmem),     # logits          (1, N)
            pl.BlockSpec(memory_space=vmem),     # gumbel          (1, N)
            pl.BlockSpec(memory_space=pl.ANY),   # w_pad stays in HBM (manual DMA)
            pl.BlockSpec(memory_space=vmem),     # b_pad           (1, NC_PAD)
        ],
        out_specs=(
            pl.BlockSpec(memory_space=vmem),     # mask   (1, N)
            pl.BlockSpec(memory_space=vmem),     # logits (B_PAD, NC_PAD)
        ),
        scratch_shapes=[
            pltpu.VMEM((N, NC_PAD), jnp.float32),   # weight landing buffer
            pltpu.SemaphoreType.DMA(()),            # weight DMA semaphore
        ],
    )(x_pad, logit2, gum2, logit1, gum1, w_pad, b_pad)

    binary_mask = jnp.broadcast_to(
        mask_flat.reshape(C, H, W)[None], (B, C, H, W))
    logits = logits_pad[:B, :num_classes]
    return binary_mask, logits


if __name__ == "__main__":
    # Small shapes consistent with the module: input_size=(C=4, H=16, W=16).
    B, C, H, W = 2, 4, 16, 16
    N = C * H * W

    key = jax.random.PRNGKey(0)
    k_x, k_logits, k_w, k_b, k_noise = jax.random.split(key, 5)

    x = jax.random.normal(k_x, (B, C, H, W), dtype=jnp.float32)
    # SparseInputMask.logits ~ randn(C, H, W)
    mask_logits = jax.random.normal(k_logits, (C, H, W), dtype=jnp.float32)
    # nn.Linear(N, num_classes): weight [num_classes, N], bias [num_classes]
    w_head = jax.random.normal(k_w, (NUM_CLASSES, N), dtype=jnp.float32) * 0.02
    b_head = jax.random.normal(k_b, (NUM_CLASSES,), dtype=jnp.float32) * 0.01
    # Gumbel noise: -log(Exp(1)) sample, deterministic from PRNGKey(0).
    gumbel = -jnp.log(jax.random.exponential(k_noise, (N,), dtype=jnp.float32))

    # One-time parameter prep (hoisted out of the forward path).
    w_pad, b_pad = prepare_head_params(w_head, b_head)

    fwd = jax.jit(sparse_autoencoder_conv_forward)
    binary_mask, logits = fwd(x, mask_logits, w_pad, b_pad, gumbel)
    jax.block_until_ready((binary_mask, logits))

    assert binary_mask.shape == (B, C, H, W)
    assert logits.shape == (B, NUM_CLASSES)
    # Exactly k active pixels per (shared) mask (mask values are exact 0/1).
    mask_sum = float(jnp.sum(binary_mask[0]))
    assert int(round(mask_sum)) == ACTIVE_NEURONS_COUNT, mask_sum

    # Pure-JAX reference check.  Selection ordering is invariant under the
    # positive 1/tau scaling, so this matches torch.topk on the raw scores.
    flat_scores = (mask_logits.reshape(-1) + gumbel) * (1.0 / TAU)
    topk_idx = jax.lax.top_k(flat_scores, ACTIVE_NEURONS_COUNT)[1]
    mask_ref_flat = jnp.zeros((N,), jnp.float32).at[topk_idx].set(1.0)
    assert jnp.array_equal(binary_mask[0].reshape(-1), mask_ref_flat)
    logits_ref = (x.reshape(B, N) * mask_ref_flat) @ w_head.T + b_head
    assert jnp.allclose(logits, logits_ref, rtol=1e-2, atol=1e-2)

    print("KERNEL_OK")
</pallas_src>

<mosaic_0001>
module attributes {stable_mosaic.version = 11 : i64} {
  func.func @_sae_kernel(%arg0: memref<8x1024xf32, #tpu.memory_space<vmem>>, %arg1: memref<8x128xf32, #tpu.memory_space<vmem>>, %arg2: memref<8x128xf32, #tpu.memory_space<vmem>>, %arg3: memref<1x1024xf32, #tpu.memory_space<vmem>>, %arg4: memref<1x1024xf32, #tpu.memory_space<vmem>>, %arg5: memref<1024x128xf32, #tpu.memory_space<any>>, %arg6: memref<1x128xf32, #tpu.memory_space<vmem>>, %arg7: memref<1x1024xf32, #tpu.memory_space<vmem>>, %arg8: memref<8x128xf32, #tpu.memory_space<vmem>>, %arg9: memref<1024x128xf32, #tpu.memory_space<vmem>>, %arg10: memref<!tpu.dma_semaphore, #tpu.memory_space<semaphore_mem>>) attributes {dimension_semantics = [], scalar_prefetch = 0 : i64, scratch_operands = 2 : i64, tpu.core_type = #tpu.core_type<tc>} {
    tpu.enqueue_dma source(%arg5 : memref<1024x128xf32, #tpu.memory_space<any>>) target(%arg9 : memref<1024x128xf32, #tpu.memory_space<vmem>>) target_semaphore(%arg10 : memref<!tpu.dma_semaphore, #tpu.memory_space<semaphore_mem>>)
    %c0 = arith.constant 0 : index
    %c0_0 = arith.constant 0 : index
    %0 = vector.load %arg1[%c0, %c0_0] : memref<8x128xf32, #tpu.memory_space<vmem>>, vector<8x128xf32>
    %c0_1 = arith.constant 0 : index
    %c0_2 = arith.constant 0 : index
    %1 = vector.load %arg2[%c0_1, %c0_2] : memref<8x128xf32, #tpu.memory_space<vmem>>, vector<8x128xf32>
    %2 = arith.addf %0, %1 : vector<8x128xf32>
    %cst = arith.constant 1.000000e+01 : f32
    %3 = vector.broadcast %cst : f32 to vector<8x128xf32>
    %4 = arith.mulf %2, %3 : vector<8x128xf32>
    %5 = vector.shape_cast %4 : vector<8x128xf32> to vector<1x8x128xf32>
    %cst_3 = arith.constant dense<0xFF800000> : vector<1xf32>
    %6 = vector.multi_reduction <maximumf>, %5, %cst_3 [1, 2] : vector<1x8x128xf32> to vector<1xf32>
    %7 = vector.shape_cast %6 : vector<1xf32> to vector<1x1x1xf32>
    %8 = vector.extract %7[0, 0, 0] : f32 from vector<1x1x1xf32>
    %9 = vector.broadcast %8 : f32 to vector<8x128xf32>
    %10 = arith.cmpf oeq, %4, %9 : vector<8x128xf32>
    %cst_4 = arith.constant 0xFF800000 : f32
    %11 = vector.broadcast %cst_4 : f32 to vector<8x128xf32>
    %12 = arith.select %10, %11, %4 : vector<8x128xi1>, vector<8x128xf32>
    %13 = vector.shape_cast %12 : vector<8x128xf32> to vector<1x8x128xf32>
    %cst_5 = arith.constant dense<0xFF800000> : vector<1xf32>
    %14 = vector.multi_reduction <maximumf>, %13, %cst_5 [1, 2] : vector<1x8x128xf32> to vector<1xf32>
    %15 = vector.shape_cast %14 : vector<1xf32> to vector<1x1x1xf32>
    %16 = vector.extract %15[0, 0, 0] : f32 from vector<1x1x1xf32>
    %17 = vector.broadcast %16 : f32 to vector<8x128xf32>
    %18 = arith.cmpf oeq, %12, %17 : vector<8x128xf32>
    %cst_6 = arith.constant 0xFF800000 : f32
    %19 = vector.broadcast %cst_6 : f32 to vector<8x128xf32>
    %20 = arith.select %18, %19, %12 : vector<8x128xi1>, vector<8x128xf32>
    %21 = vector.shape_cast %20 : vector<8x128xf32> to vector<1x8x128xf32>
    %cst_7 = arith.constant dense<0xFF800000> : vector<1xf32>
    %22 = vector.multi_reduction <maximumf>, %21, %cst_7 [1, 2] : vector<1x8x128xf32> to vector<1xf32>
    %23 = vector.shape_cast %22 : vector<1xf32> to vector<1x1x1xf32>
    %24 = vector.extract %23[0, 0, 0] : f32 from vector<1x1x1xf32>
    %25 = vector.broadcast %24 : f32 to vector<8x128xf32>
    %26 = arith.cmpf oeq, %20, %25 : vector<8x128xf32>
    %cst_8 = arith.constant 0xFF800000 : f32
    %27 = vector.broadcast %cst_8 : f32 to vector<8x128xf32>
    %28 = arith.select %26, %27, %20 : vector<8x128xi1>, vector<8x128xf32>
    %29 = vector.shape_cast %28 : vector<8x128xf32> to vector<1x8x128xf32>
    %cst_9 = arith.constant dense<0xFF800000> : vector<1xf32>
    %30 = vector.multi_reduction <maximumf>, %29, %cst_9 [1, 2] : vector<1x8x128xf32> to vector<1xf32>
    %31 = vector.shape_cast %30 : vector<1xf32> to vector<1x1x1xf32>
    %32 = vector.extract %31[0, 0, 0] : f32 from vector<1x1x1xf32>
    %33 = vector.broadcast %32 : f32 to vector<8x128xf32>
    %34 = arith.cmpf oeq, %28, %33 : vector<8x128xf32>
    %cst_10 = arith.constant 0xFF800000 : f32
    %35 = vector.broadcast %cst_10 : f32 to vector<8x128xf32>
    %36 = arith.select %34, %35, %28 : vector<8x128xi1>, vector<8x128xf32>
    %37 = vector.shape_cast %36 : vector<8x128xf32> to vector<1x8x128xf32>
    %cst_11 = arith.constant dense<0xFF800000> : vector<1xf32>
    %38 = vector.multi_reduction <maximumf>, %37, %cst_11 [1, 2] : vector<1x8x128xf32> to vector<1xf32>
    %39 = vector.shape_cast %38 : vector<1xf32> to vector<1x1x1xf32>
    %40 = vector.extract %39[0, 0, 0] : f32 from vector<1x1x1xf32>
    %41 = vector.broadcast %40 : f32 to vector<8x128xf32>
    %42 = arith.cmpf oeq, %36, %41 : vector<8x128xf32>
    %cst_12 = arith.constant 0xFF800000 : f32
    %43 = vector.broadcast %cst_12 : f32 to vector<8x128xf32>
    %44 = arith.select %42, %43, %36 : vector<8x128xi1>, vector<8x128xf32>
    %45 = vector.shape_cast %44 : vector<8x128xf32> to vector<1x8x128xf32>
    %cst_13 = arith.constant dense<0xFF800000> : vector<1xf32>
    %46 = vector.multi_reduction <maximumf>, %45, %cst_13 [1, 2] : vector<1x8x128xf32> to vector<1xf32>
    %47 = vector.shape_cast %46 : vector<1xf32> to vector<1x1x1xf32>
    %48 = vector.extract %47[0, 0, 0] : f32 from vector<1x1x1xf32>
    %49 = vector.broadcast %48 : f32 to vector<8x128xf32>
    %50 = arith.cmpf oeq, %44, %49 : vector<8x128xf32>
    %cst_14 = arith.constant 0xFF800000 : f32
    %51 = vector.broadcast %cst_14 : f32 to vector<8x128xf32>
    %52 = arith.select %50, %51, %44 : vector<8x128xi1>, vector<8x128xf32>
    %53 = vector.shape_cast %52 : vector<8x128xf32> to vector<1x8x128xf32>
    %cst_15 = arith.constant dense<0xFF800000> : vector<1xf32>
    %54 = vector.multi_reduction <maximumf>, %53, %cst_15 [1, 2] : vector<1x8x128xf32> to vector<1xf32>
    %55 = vector.shape_cast %54 : vector<1xf32> to vector<1x1x1xf32>
    %56 = vector.extract %55[0, 0, 0] : f32 from vector<1x1x1xf32>
    %57 = vector.broadcast %56 : f32 to vector<8x128xf32>
    %58 = arith.cmpf oeq, %52, %57 : vector<8x128xf32>
    %cst_16 = arith.constant 0xFF800000 : f32
    %59 = vector.broadcast %cst_16 : f32 to vector<8x128xf32>
    %60 = arith.select %58, %59, %52 : vector<8x128xi1>, vector<8x128xf32>
    %61 = vector.shape_cast %60 : vector<8x128xf32> to vector<1x8x128xf32>
    %cst_17 = arith.constant dense<0xFF800000> : vector<1xf32>
    %62 = vector.multi_reduction <maximumf>, %61, %cst_17 [1, 2] : vector<1x8x128xf32> to vector<1xf32>
    %63 = vector.shape_cast %62 : vector<1xf32> to vector<1x1x1xf32>
    %64 = vector.extract %63[0, 0, 0] : f32 from vector<1x1x1xf32>
    %c0_18 = arith.constant 0 : index
    %c0_19 = arith.constant 0 : index
    %65 = vector.load %arg3[%c0_18, %c0_19] : memref<1x1024xf32, #tpu.memory_space<vmem>>, vector<1x1024xf32>
    %c0_20 = arith.constant 0 : index
    %c0_21 = arith.constant 0 : index
    %66 = vector.load %arg4[%c0_20, %c0_21] : memref<1x1024xf32, #tpu.memory_space<vmem>>, vector<1x1024xf32>
    %67 = arith.addf %65, %66 : vector<1x1024xf32>
    %cst_22 = arith.constant 1.000000e+01 : f32
    %68 = vector.broadcast %cst_22 : f32 to vector<1x1024xf32>
    %69 = arith.mulf %67, %68 : vector<1x1024xf32>
    %70 = vector.broadcast %64 : f32 to vector<1x1024xf32>
    %71 = arith.cmpf oge, %69, %70 : vector<1x1024xf32>
    %72 = arith.extui %71 : vector<1x1024xi1> to vector<1x1024xi32>
    %73 = arith.sitofp %72 : vector<1x1024xi32> to vector<1x1024xf32>
    %c0_23 = arith.constant 0 : index
    %c0_24 = arith.constant 0 : index
    %74 = vector.load %arg7[%c0_23, %c0_24] : memref<1x1024xf32, #tpu.memory_space<vmem>>, vector<1x1024xf32>
    tpu.vector_store %arg7[%c0_23, %c0_24], %73 {strides = array<i32>} : memref<1x1024xf32, #tpu.memory_space<vmem>>, vector<1x1024xf32>,
    %c0_25 = arith.constant 0 : index
    %c0_26 = arith.constant 0 : index
    %75 = vector.load %arg0[%c0_25, %c0_26] : memref<8x1024xf32, #tpu.memory_space<vmem>>, vector<8x1024xf32>
    %76 = vector.broadcast %73 : vector<1x1024xf32> to vector<8x1024xf32>
    %77 = arith.mulf %75, %76 : vector<8x1024xf32>
    tpu.wait_dma2 semaphore(%arg10 : memref<!tpu.dma_semaphore, #tpu.memory_space<semaphore_mem>>) src(%arg5 : memref<1024x128xf32, #tpu.memory_space<any>>) dst(%arg9 : memref<1024x128xf32, #tpu.memory_space<vmem>>)
    %c0_27 = arith.constant 0 : index
    %c0_28 = arith.constant 0 : index
    %78 = vector.load %arg9[%c0_27, %c0_28] : memref<1024x128xf32, #tpu.memory_space<vmem>>, vector<1024x128xf32>
    %cst_29 = arith.constant dense<0.000000e+00> : vector<8x128xf32>
    %79 = tpu.matmul %77, %78, %cst_29 {dimension_numbers = #tpu.dot_dimension_numbers<[1], [0], [0], [1], [0, 0, 1, 1], [], []>} : vector<8x1024xf32>, vector<1024x128xf32>, vector<8x128xf32> -> vector<8x128xf32>
    %c0_30 = arith.constant 0 : index
    %c0_31 = arith.constant 0 : index
    %80 = vector.load %arg6[%c0_30, %c0_31] : memref<1x128xf32, #tpu.memory_space<vmem>>, vector<1x128xf32>
    %81 = vector.broadcast %80 : vector<1x128xf32> to vector<8x128xf32>
    %82 = arith.addf %79, %81 : vector<8x128xf32>
    %c0_32 = arith.constant 0 : index
    %c0_33 = arith.constant 0 : index
    %83 = vector.load %arg8[%c0_32, %c0_33] : memref<8x128xf32, #tpu.memory_space<vmem>>, vector<8x128xf32>
    tpu.vector_store %arg8[%c0_32, %c0_33], %82 {strides = array<i32>} : memref<8x128xf32, #tpu.memory_space<vmem>>, vector<8x128xf32>,
    return
  }
}

</mosaic_0001>

<llo_original>
// kernel: sparse_autoencoder_conv_forward.1
$region0: #{sparse_autoencoder_conv_forward.1}
  #allocation0 [shape = 'u32[]', space=smem, size = 0x4, offset = 0x4, fixed_abs, tag = 'smem constant byte address 0x4 - core index']
  #allocation1 [shape = 'u32[144,128]{1,0:T(1,128)}', space=vmem, size = 0x12000, scoped, tag = 'internal scratch']
  #allocation2 [shape = 'f32[1024,128]{1,0:T(8,128)}', space=vmem, size = 0x80000, scoped, tag = 'scratch operand']
  #allocation3 [shape = 's32[1]{0}', space=sflag, size = 0x4, scoped, tag = 'scratch operand']
  #allocation4 [shape = 's32[]', space=sflag, size = 0x4, offset = 0, fixed_abs, tag = 'sflag constant byte address 0x0 - dummy sync flag']
  #allocation5 [shape = 's32[]', space=sflag, size = 0x4, offset = 0, fixed_abs, tag = 'sflag constant byte address 0x0 - dummy sync flag']
  #allocation6 [shape = 'u32[]', space=smem, size = 0x4, offset = 0x44, fixed_abs, tag = 'smem constant byte address 0x44 - assertion arg 0']
  #allocation7 [shape = 'u32[]', space=smem, size = 0x4, offset = 0x48, fixed_abs, tag = 'smem constant byte address 0x48 - assertion arg 1']
  %s0 = inlined_call_operand.vmem [shape: f32[8,1024], index: 0, kind: input, shape index: {}]
  %s1 = inlined_call_operand.vmem [shape: f32[8,128], index: 1, kind: input, shape index: {}]
  %s2 = inlined_call_operand.vmem [shape: f32[8,128], index: 2, kind: input, shape index: {}, may-alias: {2,4}]
  %s3 = inlined_call_operand.vmem [shape: f32[1,1024], index: 3, kind: input, shape index: {}]
  %s4 = inlined_call_operand.vmem [shape: f32[1,1024], index: 4, kind: input, shape index: {}, may-alias: {2,4}]
  %s5 = inlined_call_operand.hbm [shape: f32[1024,128], index: 5, kind: input, shape index: {}]
  %s6 = inlined_call_operand.vmem [shape: f32[1,128], index: 6, kind: input, shape index: {}]
  %s7 = inlined_call_operand.vmem [shape: f32[1,1024], index: 7, kind: output, shape index: {0}]
  %s8 = inlined_call_operand.vmem [shape: f32[8,128], index: 8, kind: output, shape index: {1}]
  %9 = xla_tuple %s7, %s8
  %s10 = sld [smem:[#allocation0]]
  $region46: #{sparse_autoencoder_conv_forward.1} parent=0
    _
  %s12 = ssub.s32 1, %s10
  %s13 = scalar_select 0, %s12, %s10
  // Predicated region
  $region2: #{sparse_autoencoder_conv_forward.1} parent=0 // pred_check
    _
  $region3: #{sparse_autoencoder_conv_forward.1} parent=0 // pred_check_branch
    %15 = sbr.rel (0) target = $region5
  $region4: #{sparse_autoencoder_conv_forward.1} parent=0 // pred_region
    _
  $region5: #{sparse_autoencoder_conv_forward.1} parent=0 // pred_fallthru
    _
  // Predicated region
  $region6: #{sparse_autoencoder_conv_forward.1} parent=0 // pred_check
    _
  $region7: #{sparse_autoencoder_conv_forward.1} parent=0 // pred_check_branch
    %17 = sbr.rel (0) target = $region9
  $region8: #{sparse_autoencoder_conv_forward.1} parent=0 // pred_region
    _
  $region9: #{sparse_autoencoder_conv_forward.1} parent=0 // pred_fallthru
    _
  // Predicated region
  $region10: #{sparse_autoencoder_conv_forward.1} parent=0 // pred_check
    _
  $region11: #{sparse_autoencoder_conv_forward.1} parent=0 // pred_check_branch
    %19 = sbr.rel (0) target = $region13
  $region12: #{sparse_autoencoder_conv_forward.1} parent=0 // pred_region
    _
  $region13: #{sparse_autoencoder_conv_forward.1} parent=0 // pred_fallthru
    _
  // Predicated region
  $region14: #{sparse_autoencoder_conv_forward.1} parent=0 // pred_check
    _
  $region15: #{sparse_autoencoder_conv_forward.1} parent=0 // pred_check_branch
    %21 = sbr.rel (0) target = $region17
  $region16: #{sparse_autoencoder_conv_forward.1} parent=0 // pred_region
    _
  $region17: #{sparse_autoencoder_conv_forward.1} parent=0 // pred_fallthru
    _
  // Predicated region
  $region18: #{sparse_autoencoder_conv_forward.1} parent=0 // pred_check
    _
  $region19: #{sparse_autoencoder_conv_forward.1} parent=0 // pred_check_branch
    %23 = sbr.rel (0) target = $region21
  $region20: #{sparse_autoencoder_conv_forward.1} parent=0 // pred_region
    _
  $region21: #{sparse_autoencoder_conv_forward.1} parent=0 // pred_fallthru
    _
  // Predicated region
  $region22: #{sparse_autoencoder_conv_forward.1} parent=0 // pred_check
    _
  $region23: #{sparse_autoencoder_conv_forward.1} parent=0 // pred_check_branch
    %25 = sbr.rel (0) target = $region25
  $region24: #{sparse_autoencoder_conv_forward.1} parent=0 // pred_region
    _
  $region25: #{sparse_autoencoder_conv_forward.1} parent=0 // pred_fallthru
    _
  // Predicated region
  $region26: #{sparse_autoencoder_conv_forward.1} parent=0 // pred_check
    _
  $region27: #{sparse_autoencoder_conv_forward.1} parent=0 // pred_check_branch
    %27 = sbr.rel target = $region29
  $region28: #{sparse_autoencoder_conv_forward.1} parent=0 // pred_region
    %28 = sst [smem:[#allocation6]] [#allocation5]
    %29 = sst [smem:[#allocation7]] [#allocation4]
  $region29: #{sparse_autoencoder_conv_forward.1} parent=0 // pred_fallthru
    _
  %31 = shalt.err (0)
  %s33 = sshll.u32 [#allocation2], 4
  %s34 = int_to_ptr.vmem [resolvable:$true] %s33
  %36 = dma.hbm_to_vmem [thread:$0]  %s5, 16384, %s34, [#allocation3]
  %v37 = vld [vmem:[%s1] sm:$0xff]
  %v38 = vld [vmem:[%s2] sm:$0xff]
  %v39 = vadd.f32 %v37, %v38
  %v40 = vmul.f32 %v39, 10.0
  %41 = vmax.xlane.f32.xlu0 %v40
  %v42 = vpop.xlane.xlu0 %41
  %v43 = vrot.slane %v42, 4
  %v44 = vmax.f32 %v42, %v43
  %v45 = vrot.slane %v44, 2
  %v46 = vmax.f32 %v44, %v45
  %v47 = vrot.slane %v46, 1
  %v48 = vmax.f32 %v46, %v47
  %s49 = vtos %v48
  %v50 = vstv %s49
  %vm51 = vcmp.eq.f32.partialorder %v40, %v50
  %v52 = vsel %vm51, -inf, %v40
  %53 = vmax.xlane.f32.xlu0 %v52
  %v54 = vpop.xlane.xlu0 %53
  %v55 = vrot.slane %v54, 4
  %v56 = vmax.f32 %v54, %v55
  %v57 = vrot.slane %v56, 2
  %v58 = vmax.f32 %v56, %v57
  %v59 = vrot.slane %v58, 1
  %v60 = vmax.f32 %v58, %v59
  %s61 = vtos %v60
  %v62 = vstv %s61
  %vm63 = vcmp.eq.f32.partialorder %v52, %v62
  %v64 = vsel %vm63, -inf, %v52
  %65 = vmax.xlane.f32.xlu0 %v64
  %v66 = vpop.xlane.xlu0 %65
  %v67 = vrot.slane %v66, 4
  %v68 = vmax.f32 %v66, %v67
  %v69 = vrot.slane %v68, 2
  %v70 = vmax.f32 %v68, %v69
  %v71 = vrot.slane %v70, 1
  %v72 = vmax.f32 %v70, %v71
  %s73 = vtos %v72
  %v74 = vstv %s73
  %vm75 = vcmp.eq.f32.partialorder %v64, %v74
  %v76 = vsel %vm75, -inf, %v64
  %77 = vmax.xlane.f32.xlu0 %v76
  %v78 = vpop.xlane.xlu0 %77
  %v79 = vrot.slane %v78, 4
  %v80 = vmax.f32 %v78, %v79
  %v81 = vrot.slane %v80, 2
  %v82 = vmax.f32 %v80, %v81
  %v83 = vrot.slane %v82, 1
  %v84 = vmax.f32 %v82, %v83
  %s85 = vtos %v84
  %v86 = vstv %s85
  %vm87 = vcmp.eq.f32.partialorder %v76, %v86
  %v88 = vsel %vm87, -inf, %v76
  %89 = vmax.xlane.f32.xlu0 %v88
  %v90 = vpop.xlane.xlu0 %89
  %v91 = vrot.slane %v90, 4
  %v92 = vmax.f32 %v90, %v91
  %v93 = vrot.slane %v92, 2
  %v94 = vmax.f32 %v92, %v93
  %v95 = vrot.slane %v94, 1
  %v96 = vmax.f32 %v94, %v95
  %s97 = vtos %v96
  %v98 = vstv %s97
  %vm99 = vcmp.eq.f32.partialorder %v88, %v98
  %v100 = vsel %vm99, -inf, %v88
  %101 = vmax.xlane.f32.xlu0 %v100
  %v102 = vpop.xlane.xlu0 %101
  %v103 = vrot.slane %v102, 4
  %v104 = vmax.f32 %v102, %v103
  %v105 = vrot.slane %v104, 2
  %v106 = vmax.f32 %v104, %v105
  %v107 = vrot.slane %v106, 1
  %v108 = vmax.f32 %v106, %v107
  %s109 = vtos %v108
  %v110 = vstv %s109
  %vm111 = vcmp.eq.f32.partialorder %v100, %v110
  %v112 = vsel %vm111, -inf, %v100
  %113 = vmax.xlane.f32.xlu0 %v112
  %v114 = vpop.xlane.xlu0 %113
  %v115 = vrot.slane %v114, 4
  %v116 = vmax.f32 %v114, %v115
  %v117 = vrot.slane %v116, 2
  %v118 = vmax.f32 %v116, %v117
  %v119 = vrot.slane %v118, 1
  %v120 = vmax.f32 %v118, %v119
  %s121 = vtos %v120
  %v122 = vstv %s121
  %vm123 = vcmp.eq.f32.partialorder %v112, %v122
  %v124 = vsel %vm123, -inf, %v112
  %125 = vmax.xlane.f32.xlu0 %v124
  %v126 = vpop.xlane.xlu0 %125
  %v127 = vrot.slane %v126, 4
  %v128 = vmax.f32 %v126, %v127
  %v129 = vrot.slane %v128, 2
  %v130 = vmax.f32 %v128, %v129
  %v131 = vrot.slane %v130, 1
  %v132 = vmax.f32 %v130, %v131
  %s133 = vtos %v132
  %v134 = vld [vmem:[%s3] sm:$0xff]
  %v135 = vld [vmem:[%s4] sm:$0xff]
  %v136 = vadd.f32 %v134, %v135
  %v137 = vmul.f32 %v136, 10.0
  %v138 = vstv %s133
  %vm139 = vcmp.ge.f32.partialorder %v137, %v138
  %v140 = vsel %vm139, 1, 0
  %v141 = vcvt.s32.f32 %v140
  %142 = vst [vmem:[%s7] sm:$0xff] %v141
  %v143 = vld [vmem:[%s0] sm:$0xff]
  %v144 = vld [vmem:[%s0 + $0x8] sm:$0xff]
  %v145 = vld [vmem:[%s0 + $0x10] sm:$0xff]
  %v146 = vld [vmem:[%s0 + $0x18] sm:$0xff]
  %v147 = vld [vmem:[%s0 + $0x20] sm:$0xff]
  %v148 = vld [vmem:[%s0 + $0x28] sm:$0xff]
  %v149 = vld [vmem:[%s0 + $0x30] sm:$0xff]
  %v150 = vld [vmem:[%s0 + $0x38] sm:$0xff]
  %v152 = vlaneseq
  %v153 = vshrl.u32 %v152, 7
  %v154 = vsub.s32 0, %v153
  %v155 = vrot.slane %v141, %v154
  %v156 = vlaneseq
  %v157 = vshrl.u32 %v156, 7
  %v158 = vsub.s32 1, %v157
  %v159 = vrot.slane %v141, %v158
  %v160 = vlaneseq
  %v161 = vshrl.u32 %v160, 7
  %v162 = vsub.s32 2, %v161
  %v163 = vrot.slane %v141, %v162
  %v164 = vlaneseq
  %v165 = vshrl.u32 %v164, 7
  %v166 = vsub.s32 3, %v165
  %v167 = vrot.slane %v141, %v166
  %v168 = vlaneseq
  %v169 = vshrl.u32 %v168, 7
  %v170 = vsub.s32 4, %v169
  %v171 = vrot.slane %v141, %v170
  %v172 = vlaneseq
  %v173 = vshrl.u32 %v172, 7
  %v174 = vsub.s32 5, %v173
  %v175 = vrot.slane %v141, %v174
  %v176 = vlaneseq
  %v177 = vshrl.u32 %v176, 7
  %v178 = vsub.s32 6, %v177
  %v179 = vrot.slane %v141, %v178
  %v180 = vlaneseq
  %v181 = vshrl.u32 %v180, 7
  %v182 = vsub.s32 7, %v181
  %v183 = vrot.slane %v141, %v182
  %v192 = vmul.f32 %v143, %v155
  %v193 = vmul.f32 %v144, %v159
  %v194 = vmul.f32 %v145, %v163
  %v195 = vmul.f32 %v146, %v167
  %v196 = vmul.f32 %v147, %v171
  %v197 = vmul.f32 %v148, %v175
  %v198 = vmul.f32 %v149, %v179
  %v199 = vmul.f32 %v150, %v183
  %s200 = smul.u32 1024, 1
  %s201 = sshll.u32 %s200, 4
  %202 = dma.done [#allocation3], %s201
  %v203 = vld [vmem:[#allocation2] sm:$0xff]
  %v204 = vld [vmem:[#allocation2 + $0x8] sm:$0xff]
  %v205 = vld [vmem:[#allocation2 + $0x10] sm:$0xff]
  %v206 = vld [vmem:[#allocation2 + $0x18] sm:$0xff]
  %v207 = vld [vmem:[#allocation2 + $0x20] sm:$0xff]
  %v208 = vld [vmem:[#allocation2 + $0x28] sm:$0xff]
  %v209 = vld [vmem:[#allocation2 + $0x30] sm:$0xff]
  %v210 = vld [vmem:[#allocation2 + $0x38] sm:$0xff]
  %v211 = vld [vmem:[#allocation2 + $0x40] sm:$0xff]
  %v212 = vld [vmem:[#allocation2 + $0x48] sm:$0xff]
  %v213 = vld [vmem:[#allocation2 + $0x50] sm:$0xff]
  %v214 = vld [vmem:[#allocation2 + $0x58] sm:$0xff]
  %v215 = vld [vmem:[#allocation2 + $0x60] sm:$0xff]
  %v216 = vld [vmem:[#allocation2 + $0x68] sm:$0xff]
  %v217 = vld [vmem:[#allocation2 + $0x70] sm:$0xff]
  %v218 = vld [vmem:[#allocation2 + $0x78] sm:$0xff]
  %v219 = vld [vmem:[#allocation2 + $0x80] sm:$0xff]
  %v220 = vld [vmem:[#allocation2 + $0x88] sm:$0xff]
  %v221 = vld [vmem:[#allocation2 + $0x90] sm:$0xff]
  %v222 = vld [vmem:[#allocation2 + $0x98] sm:$0xff]
  %v223 = vld [vmem:[#allocation2 + $0xa0] sm:$0xff]
  %v224 = vld [vmem:[#allocation2 + $0xa8] sm:$0xff]
  %v225 = vld [vmem:[#allocation2 + $0xb0] sm:$0xff]
  %v226 = vld [vmem:[#allocation2 + $0xb8] sm:$0xff]
  %v227 = vld [vmem:[#allocation2 + $0xc0] sm:$0xff]
  %v228 = vld [vmem:[#allocation2 + $0xc8] sm:$0xff]
  %v229 = vld [vmem:[#allocation2 + $0xd0] sm:$0xff]
  %v230 = vld [vmem:[#allocation2 + $0xd8] sm:$0xff]
  %v231 = vld [vmem:[#allocation2 + $0xe0] sm:$0xff]
  %v232 = vld [vmem:[#allocation2 + $0xe8] sm:$0xff]
  %v233 = vld [vmem:[#allocation2 + $0xf0] sm:$0xff]
  %v234 = vld [vmem:[#allocation2 + $0xf8] sm:$0xff]
  %v235 = vld [vmem:[#allocation2 + $0x100] sm:$0xff]
  %v236 = vld [vmem:[#allocation2 + $0x108] sm:$0xff]
  %v237 = vld [vmem:[#allocation2 + $0x110] sm:$0xff]
  %v238 = vld [vmem:[#allocation2 + $0x118] sm:$0xff]
  %v239 = vld [vmem:[#allocation2 + $0x120] sm:$0xff]
  %v240 = vld [vmem:[#allocation2 + $0x128] sm:$0xff]
  %v241 = vld [vmem:[#allocation2 + $0x130] sm:$0xff]
  %v242 = vld [vmem:[#allocation2 + $0x138] sm:$0xff]
  %v243 = vld [vmem:[#allocation2 + $0x140] sm:$0xff]
  %v244 = vld [vmem:[#allocation2 + $0x148] sm:$0xff]
  %v245 = vld [vmem:[#allocation2 + $0x150] sm:$0xff]
  %v246 = vld [vmem:[#allocation2 + $0x158] sm:$0xff]
  %v247 = vld [vmem:[#allocation2 + $0x160] sm:$0xff]
  %v248 = vld [vmem:[#allocation2 + $0x168] sm:$0xff]
  %v249 = vld [vmem:[#allocation2 + $0x170] sm:$0xff]
  %v250 = vld [vmem:[#allocation2 + $0x178] sm:$0xff]
  %v251 = vld [vmem:[#allocation2 + $0x180] sm:$0xff]
  %v252 = vld [vmem:[#allocation2 + $0x188] sm:$0xff]
  %v253 = vld [vmem:[#allocation2 + $0x190] sm:$0xff]
  %v254 = vld [vmem:[#allocation2 + $0x198] sm:$0xff]
  %v255 = vld [vmem:[#allocation2 + $0x1a0] sm:$0xff]
  %v256 = vld [vmem:[#allocation2 + $0x1a8] sm:$0xff]
  %v257 = vld [vmem:[#allocation2 + $0x1b0] sm:$0xff]
  %v258 = vld [vmem:[#allocation2 + $0x1b8] sm:$0xff]
  %v259 = vld [vmem:[#allocation2 + $0x1c0] sm:$0xff]
  %v260 = vld [vmem:[#allocation2 + $0x1c8] sm:$0xff]
  %v261 = vld [vmem:[#allocation2 + $0x1d0] sm:$0xff]
  %v262 = vld [vmem:[#allocation2 + $0x1d8] sm:$0xff]
  %v263 = vld [vmem:[#allocation2 + $0x1e0] sm:$0xff]
  %v264 = vld [vmem:[#allocation2 + $0x1e8] sm:$0xff]
  %v265 = vld [vmem:[#allocation2 + $0x1f0] sm:$0xff]
  %v266 = vld [vmem:[#allocation2 + $0x1f8] sm:$0xff]
  %v267 = vld [vmem:[#allocation2 + $0x200] sm:$0xff]
  %v268 = vld [vmem:[#allocation2 + $0x208] sm:$0xff]
  %v269 = vld [vmem:[#allocation2 + $0x210] sm:$0xff]
  %v270 = vld [vmem:[#allocation2 + $0x218] sm:$0xff]
  %v271 = vld [vmem:[#allocation2 + $0x220] sm:$0xff]
  %v272 = vld [vmem:[#allocation2 + $0x228] sm:$0xff]
  %v273 = vld [vmem:[#allocation2 + $0x230] sm:$0xff]
  %v274 = vld [vmem:[#allocation2 + $0x238] sm:$0xff]
  %v275 = vld [vmem:[#allocation2 + $0x240] sm:$0xff]
  %v276 = vld [vmem:[#allocation2 + $0x248] sm:$0xff]
  %v277 = vld [vmem:[#allocation2 + $0x250] sm:$0xff]
  %v278 = vld [vmem:[#allocation2 + $0x258] sm:$0xff]
  %v279 = vld [vmem:[#allocation2 + $0x260] sm:$0xff]
  %v280 = vld [vmem:[#allocation2 + $0x268] sm:$0xff]
  %v281 = vld [vmem:[#allocation2 + $0x270] sm:$0xff]
  %v282 = vld [vmem:[#allocation2 + $0x278] sm:$0xff]
  %v283 = vld [vmem:[#allocation2 + $0x280] sm:$0xff]
  %v284 = vld [vmem:[#allocation2 + $0x288] sm:$0xff]
  %v285 = vld [vmem:[#allocation2 + $0x290] sm:$0xff]
  %v286 = vld [vmem:[#allocation2 + $0x298] sm:$0xff]
  %v287 = vld [vmem:[#allocation2 + $0x2a0] sm:$0xff]
  %v288 = vld [vmem:[#allocation2 + $0x2a8] sm:$0xff]
  %v289 = vld [vmem:[#allocation2 + $0x2b0] sm:$0xff]
  %v290 = vld [vmem:[#allocation2 + $0x2b8] sm:$0xff]
  %v291 = vld [vmem:[#allocation2 + $0x2c0] sm:$0xff]
  %v292 = vld [vmem:[#allocation2 + $0x2c8] sm:$0xff]
  %v293 = vld [vmem:[#allocation2 + $0x2d0] sm:$0xff]
  %v294 = vld [vmem:[#allocation2 + $0x2d8] sm:$0xff]
  %v295 = vld [vmem:[#allocation2 + $0x2e0] sm:$0xff]
  %v296 = vld [vmem:[#allocation2 + $0x2e8] sm:$0xff]
  %v297 = vld [vmem:[#allocation2 + $0x2f0] sm:$0xff]
  %v298 = vld [vmem:[#allocation2 + $0x2f8] sm:$0xff]
  %v299 = vld [vmem:[#allocation2 + $0x300] sm:$0xff]
  %v300 = vld [vmem:[#allocation2 + $0x308] sm:$0xff]
  %v301 = vld [vmem:[#allocation2 + $0x310] sm:$0xff]
  %v302 = vld [vmem:[#allocation2 + $0x318] sm:$0xff]
  %v303 = vld [vmem:[#allocation2 + $0x320] sm:$0xff]
  %v304 = vld [vmem:[#allocation2 + $0x328] sm:$0xff]
  %v305 = vld [vmem:[#allocation2 + $0x330] sm:$0xff]
  %v306 = vld [vmem:[#allocation2 + $0x338] sm:$0xff]
  %v307 = vld [vmem:[#allocation2 + $0x340] sm:$0xff]
  %v308 = vld [vmem:[#allocation2 + $0x348] sm:$0xff]
  %v309 = vld [vmem:[#allocation2 + $0x350] sm:$0xff]
  %v310 = vld [vmem:[#allocation2 + $0x358] sm:$0xff]
  %v311 = vld [vmem:[#allocation2 + $0x360] sm:$0xff]
  %v312 = vld [vmem:[#allocation2 + $0x368] sm:$0xff]
  %v313 = vld [vmem:[#allocation2 + $0x370] sm:$0xff]
  %v314 = vld [vmem:[#allocation2 + $0x378] sm:$0xff]
  %v315 = vld [vmem:[#allocation2 + $0x380] sm:$0xff]
  %v316 = vld [vmem:[#allocation2 + $0x388] sm:$0xff]
  %v317 = vld [vmem:[#allocation2 + $0x390] sm:$0xff]
  %v318 = vld [vmem:[#allocation2 + $0x398] sm:$0xff]
  %v319 = vld [vmem:[#allocation2 + $0x3a0] sm:$0xff]
  %v320 = vld [vmem:[#allocation2 + $0x3a8] sm:$0xff]
  %v321 = vld [vmem:[#allocation2 + $0x3b0] sm:$0xff]
  %v322 = vld [vmem:[#allocation2 + $0x3b8] sm:$0xff]
  %v323 = vld [vmem:[#allocation2 + $0x3c0] sm:$0xff]
  %v324 = vld [vmem:[#allocation2 + $0x3c8] sm:$0xff]
  %v325 = vld [vmem:[#allocation2 + $0x3d0] sm:$0xff]
  %v326 = vld [vmem:[#allocation2 + $0x3d8] sm:$0xff]
  %v327 = vld [vmem:[#allocation2 + $0x3e0] sm:$0xff]
  %v328 = vld [vmem:[#allocation2 + $0x3e8] sm:$0xff]
  %v329 = vld [vmem:[#allocation2 + $0x3f0] sm:$0xff]
  %v330 = vld [vmem:[#allocation2 + $0x3f8] sm:$0xff]
  %v331 = vld [vmem:[%s6] sm:$0x1]
  %v333 = vlaneseq
  %v334 = vshrl.u32 %v333, 7
  %v335 = vsub.s32 0, %v334
  %v336 = vrot.slane %v331, %v335
  %338 = vmatprep.subr.mxu0 0.0
  %339 = vmatpush1.msra.mxu0 %v218
  %340 = vmatprep.subr.mxu0 0.0
  %341 = vmatpush1.msra.mxu0 %v217
  %342 = vmatprep.subr.mxu0 0.0
  %343 = vmatpush1.msra.mxu0 %v216
  %344 = vmatprep.subr.mxu0 0.0
  %345 = vmatpush1.msra.mxu0 %v215
  %346 = vmatprep.subr.mxu0 0.0
  %347 = vmatpush1.msra.mxu0 %v214
  %348 = vmatprep.subr.mxu0 0.0
  %349 = vmatpush1.msra.mxu0 %v213
  %350 = vmatprep.subr.mxu0 0.0
  %351 = vmatpush1.msra.mxu0 %v212
  %352 = vmatprep.subr.mxu0 0.0
  %353 = vmatpush1.msra.mxu0 %v211
  %354 = vmatprep.subr.mxu0 0.0
  %355 = vmatpush1.msra.mxu0 %v210
  %356 = vmatprep.subr.mxu0 0.0
  %357 = vmatpush1.msra.mxu0 %v209
  %358 = vmatprep.subr.mxu0 0.0
  %359 = vmatpush1.msra.mxu0 %v208
  %360 = vmatprep.subr.mxu0 0.0
  %361 = vmatpush1.msra.mxu0 %v207
  %362 = vmatprep.subr.mxu0 0.0
  %363 = vmatpush1.msra.mxu0 %v206
  %364 = vmatprep.subr.mxu0 0.0
  %365 = vmatpush1.msra.mxu0 %v205
  %366 = vmatprep.subr.mxu0 0.0
  %367 = vmatpush1.msra.mxu0 %v204
  %368 = vmatprep.subr.mxu0 0.0
  %369 = vmatpush1.msra.mxu0 %v203
  %370 = vmatprep.subr.mxu0 0.0
  %371 = vmatpush2.msra.mxu0 %v234
  %372 = vmatprep.subr.mxu0 0.0
  %373 = vmatpush2.msra.mxu0 %v233
  %374 = vmatprep.subr.mxu0 0.0
  %375 = vmatpush2.msra.mxu0 %v232
  %376 = vmatprep.subr.mxu0 0.0
  %377 = vmatpush2.msra.mxu0 %v231
  %378 = vmatprep.subr.mxu0 0.0
  %379 = vmatpush2.msra.mxu0 %v230
  %380 = vmatprep.subr.mxu0 0.0
  %381 = vmatpush2.msra.mxu0 %v229
  %382 = vmatprep.subr.mxu0 0.0
  %383 = vmatpush2.msra.mxu0 %v228
  %384 = vmatprep.subr.mxu0 0.0
  %385 = vmatpush2.msra.mxu0 %v227
  %386 = vmatprep.subr.mxu0 0.0
  %387 = vmatpush2.msra.mxu0 %v226
  %388 = vmatprep.subr.mxu0 0.0
  %389 = vmatpush2.msra.mxu0 %v225
  %390 = vmatprep.subr.mxu0 0.0
  %391 = vmatpush2.msra.mxu0 %v224
  %392 = vmatprep.subr.mxu0 0.0
  %393 = vmatpush2.msra.mxu0 %v223
  %394 = vmatprep.subr.mxu0 0.0
  %395 = vmatpush2.msra.mxu0 %v222
  %396 = vmatprep.subr.mxu0 0.0
  %397 = vmatpush2.msra.mxu0 %v221
  %398 = vmatprep.subr.mxu0 0.0
  %399 = vmatpush2.msra.mxu0 %v220
  %400 = vmatprep.subr.mxu0 0.0
  %401 = vmatpush2.msra.mxu0 %v219
  %402 = vmatprep.mubr.f32.mxu0 %v193
  %403 = vmatmul.mubr.f32.gmra.mxu0 %v192
  %v404 = vpop.f32.mrf.mxu0
  %v405 = vadd.f32 %v336, %v404
  %v406 = vpop.f32.mrf.mxu0
  %407 = vdwg.mxu0
  %408 = vmatprep.subr.mxu0 0.0
  %409 = vmatpush1.msra.mxu0 %v250
  %410 = vmatprep.subr.mxu0 0.0
  %411 = vmatpush1.msra.mxu0 %v249
  %412 = vmatprep.subr.mxu0 0.0
  %413 = vmatpush1.msra.mxu0 %v248
  %414 = vmatprep.subr.mxu0 0.0
  %415 = vmatpush1.msra.mxu0 %v247
  %416 = vmatprep.subr.mxu0 0.0
  %417 = vmatpush1.msra.mxu0 %v246
  %418 = vmatprep.subr.mxu0 0.0
  %419 = vmatpush1.msra.mxu0 %v245
  %420 = vmatprep.subr.mxu0 0.0
  %421 = vmatpush1.msra.mxu0 %v244
  %422 = vmatprep.subr.mxu0 0.0
  %423 = vmatpush1.msra.mxu0 %v243
  %424 = vmatprep.subr.mxu0 0.0
  %425 = vmatpush1.msra.mxu0 %v242
  %426 = vmatprep.subr.mxu0 0.0
  %427 = vmatpush1.msra.mxu0 %v241
  %428 = vmatprep.subr.mxu0 0.0
  %429 = vmatpush1.msra.mxu0 %v240
  %430 = vmatprep.subr.mxu0 0.0
  %431 = vmatpush1.msra.mxu0 %v239
  %432 = vmatprep.subr.mxu0 0.0
  %433 = vmatpush1.msra.mxu0 %v238
  %434 = vmatprep.subr.mxu0 0.0
  %435 = vmatpush1.msra.mxu0 %v237
  %436 = vmatprep.subr.mxu0 0.0
  %437 = vmatpush1.msra.mxu0 %v236
  %438 = vmatprep.subr.mxu0 0.0
  %439 = vmatpush1.msra.mxu0 %v235
  %440 = vmatprep.subr.mxu0 0.0
  %441 = vmatpush2.msra.mxu0 %v266
  %442 = vmatprep.subr.mxu0 0.0
  %443 = vmatpush2.msra.mxu0 %v265
  %444 = vmatprep.subr.mxu0 0.0
  %445 = vmatpush2.msra.mxu0 %v264
  %446 = vmatprep.subr.mxu0 0.0
  %447 = vmatpush2.msra.mxu0 %v263
  %448 = vmatprep.subr.mxu0 0.0
  %449 = vmatpush2.msra.mxu0 %v262
  %450 = vmatprep.subr.mxu0 0.0
  %451 = vmatpush2.msra.mxu0 %v261
  %452 = vmatprep.subr.mxu0 0.0
  %453 = vmatpush2.msra.mxu0 %v260
  %454 = vmatprep.subr.mxu0 0.0
  %455 = vmatpush2.msra.mxu0 %v259
  %456 = vmatprep.subr.mxu0 0.0
  %457 = vmatpush2.msra.mxu0 %v258
  %458 = vmatprep.subr.mxu0 0.0
  %459 = vmatpush2.msra.mxu0 %v257
  %460 = vmatprep.subr.mxu0 0.0
  %461 = vmatpush2.msra.mxu0 %v256
  %462 = vmatprep.subr.mxu0 0.0
  %463 = vmatpush2.msra.mxu0 %v255
  %464 = vmatprep.subr.mxu0 0.0
  %465 = vmatpush2.msra.mxu0 %v254
  %466 = vmatprep.subr.mxu0 0.0
  %467 = vmatpush2.msra.mxu0 %v253
  %468 = vmatprep.subr.mxu0 0.0
  %469 = vmatpush2.msra.mxu0 %v252
  %470 = vmatprep.subr.mxu0 0.0
  %471 = vmatpush2.msra.mxu0 %v251
  %472 = vmatprep.mubr.f32.mxu0 %v195
  %473 = vmatmul.mubr.f32.gmra.mxu0 %v194
  %v474 = vpop.f32.mrf.mxu0
  %v475 = vadd.f32 %v405, %v474
  %v476 = vpop.f32.mrf.mxu0
  %477 = vdwg.mxu0
  %478 = vmatprep.subr.mxu0 0.0
  %479 = vmatpush1.msra.mxu0 %v282
  %480 = vmatprep.subr.mxu0 0.0
  %481 = vmatpush1.msra.mxu0 %v281
  %482 = vmatprep.subr.mxu0 0.0
  %483 = vmatpush1.msra.mxu0 %v280
  %484 = vmatprep.subr.mxu0 0.0
  %485 = vmatpush1.msra.mxu0 %v279
  %486 = vmatprep.subr.mxu0 0.0
  %487 = vmatpush1.msra.mxu0 %v278
  %488 = vmatprep.subr.mxu0 0.0
  %489 = vmatpush1.msra.mxu0 %v277
  %490 = vmatprep.subr.mxu0 0.0
  %491 = vmatpush1.msra.mxu0 %v276
  %492 = vmatprep.subr.mxu0 0.0
  %493 = vmatpush1.msra.mxu0 %v275
  %494 = vmatprep.subr.mxu0 0.0
  %495 = vmatpush1.msra.mxu0 %v274
  %496 = vmatprep.subr.mxu0 0.0
  %497 = vmatpush1.msra.mxu0 %v273
  %498 = vmatprep.subr.mxu0 0.0
  %499 = vmatpush1.msra.mxu0 %v272
  %500 = vmatprep.subr.mxu0 0.0
  %501 = vmatpush1.msra.mxu0 %v271
  %502 = vmatprep.subr.mxu0 0.0
  %503 = vmatpush1.msra.mxu0 %v270
  %504 = vmatprep.subr.mxu0 0.0
  %505 = vmatpush1.msra.mxu0 %v269
  %506 = vmatprep.subr.mxu0 0.0
  %507 = vmatpush1.msra.mxu0 %v268
  %508 = vmatprep.subr.mxu0 0.0
  %509 = vmatpush1.msra.mxu0 %v267
  %510 = vmatprep.subr.mxu0 0.0
  %511 = vmatpush2.msra.mxu0 %v298
  %512 = vmatprep.subr.mxu0 0.0
  %513 = vmatpush2.msra.mxu0 %v297
  %514 = vmatprep.subr.mxu0 0.0
  %515 = vmatpush2.msra.mxu0 %v296
  %516 = vmatprep.subr.mxu0 0.0
  %517 = vmatpush2.msra.mxu0 %v295
  %518 = vmatprep.subr.mxu0 0.0
  %519 = vmatpush2.msra.mxu0 %v294
  %520 = vmatprep.subr.mxu0 0.0
  %521 = vmatpush2.msra.mxu0 %v293
  %522 = vmatprep.subr.mxu0 0.0
  %523 = vmatpush2.msra.mxu0 %v292
  %524 = vmatprep.subr.mxu0 0.0
  %525 = vmatpush2.msra.mxu0 %v291
  %526 = vmatprep.subr.mxu0 0.0
  %527 = vmatpush2.msra.mxu0 %v290
  %528 = vmatprep.subr.mxu0 0.0
  %529 = vmatpush2.msra.mxu0 %v289
  %530 = vmatprep.subr.mxu0 0.0
  %531 = vmatpush2.msra.mxu0 %v288
  %532 = vmatprep.subr.mxu0 0.0
  %533 = vmatpush2.msra.mxu0 %v287
  %534 = vmatprep.subr.mxu0 0.0
  %535 = vmatpush2.msra.mxu0 %v286
  %536 = vmatprep.subr.mxu0 0.0
  %537 = vmatpush2.msra.mxu0 %v285
  %538 = vmatprep.subr.mxu0 0.0
  %539 = vmatpush2.msra.mxu0 %v284
  %540 = vmatprep.subr.mxu0 0.0
  %541 = vmatpush2.msra.mxu0 %v283
  %542 = vmatprep.mubr.f32.mxu0 %v197
  %543 = vmatmul.mubr.f32.gmra.mxu0 %v196
  %v544 = vpop.f32.mrf.mxu0
  %v545 = vadd.f32 %v475, %v544
  %v546 = vpop.f32.mrf.mxu0
  %547 = vdwg.mxu0
  %548 = vmatprep.subr.mxu0 0.0
  %549 = vmatpush1.msra.mxu0 %v314
  %550 = vmatprep.subr.mxu0 0.0
  %551 = vmatpush1.msra.mxu0 %v313
  %552 = vmatprep.subr.mxu0 0.0
  %553 = vmatpush1.msra.mxu0 %v312
  %554 = vmatprep.subr.mxu0 0.0
  %555 = vmatpush1.msra.mxu0 %v311
  %556 = vmatprep.subr.mxu0 0.0
  %557 = vmatpush1.msra.mxu0 %v310
  %558 = vmatprep.subr.mxu0 0.0
  %559 = vmatpush1.msra.mxu0 %v309
  %560 = vmatprep.subr.mxu0 0.0
  %561 = vmatpush1.msra.mxu0 %v308
  %562 = vmatprep.subr.mxu0 0.0
  %563 = vmatpush1.msra.mxu0 %v307
  %564 = vmatprep.subr.mxu0 0.0
  %565 = vmatpush1.msra.mxu0 %v306
  %566 = vmatprep.subr.mxu0 0.0
  %567 = vmatpush1.msra.mxu0 %v305
  %568 = vmatprep.subr.mxu0 0.0
  %569 = vmatpush1.msra.mxu0 %v304
  %570 = vmatprep.subr.mxu0 0.0
  %571 = vmatpush1.msra.mxu0 %v303
  %572 = vmatprep.subr.mxu0 0.0
  %573 = vmatpush1.msra.mxu0 %v302
  %574 = vmatprep.subr.mxu0 0.0
  %575 = vmatpush1.msra.mxu0 %v301
  %576 = vmatprep.subr.mxu0 0.0
  %577 = vmatpush1.msra.mxu0 %v300
  %578 = vmatprep.subr.mxu0 0.0
  %579 = vmatpush1.msra.mxu0 %v299
  %580 = vmatprep.subr.mxu0 0.0
  %581 = vmatpush2.msra.mxu0 %v330
  %582 = vmatprep.subr.mxu0 0.0
  %583 = vmatpush2.msra.mxu0 %v329
  %584 = vmatprep.subr.mxu0 0.0
  %585 = vmatpush2.msra.mxu0 %v328
  %586 = vmatprep.subr.mxu0 0.0
  %587 = vmatpush2.msra.mxu0 %v327
  %588 = vmatprep.subr.mxu0 0.0
  %589 = vmatpush2.msra.mxu0 %v326
  %590 = vmatprep.subr.mxu0 0.0
  %591 = vmatpush2.msra.mxu0 %v325
  %592 = vmatprep.subr.mxu0 0.0
  %593 = vmatpush2.msra.mxu0 %v324
  %594 = vmatprep.subr.mxu0 0.0
  %595 = vmatpush2.msra.mxu0 %v323
  %596 = vmatprep.subr.mxu0 0.0
  %597 = vmatpush2.msra.mxu0 %v322
  %598 = vmatprep.subr.mxu0 0.0
  %599 = vmatpush2.msra.mxu0 %v321
  %600 = vmatprep.subr.mxu0 0.0
  %601 = vmatpush2.msra.mxu0 %v320
  %602 = vmatprep.subr.mxu0 0.0
  %603 = vmatpush2.msra.mxu0 %v319
  %604 = vmatprep.subr.mxu0 0.0
  %605 = vmatpush2.msra.mxu0 %v318
  %606 = vmatprep.subr.mxu0 0.0
  %607 = vmatpush2.msra.mxu0 %v317
  %608 = vmatprep.subr.mxu0 0.0
  %609 = vmatpush2.msra.mxu0 %v316
  %610 = vmatprep.subr.mxu0 0.0
  %611 = vmatpush2.msra.mxu0 %v315
  %612 = vmatprep.mubr.f32.mxu0 %v199
  %613 = vmatmul.mubr.f32.gmra.mxu0 %v198
  %v614 = vpop.f32.mrf.mxu0
  %v615 = vadd.f32 %v545, %v614
  %v616 = vpop.f32.mrf.mxu0
  %617 = vdwg.mxu0
  %618 = vst [vmem:[%s8] sm:$0xff] %v615
  // Predicated region
  $region30: #{sparse_autoencoder_conv_forward.1} parent=0 // pred_check
    _
  $region31: #{sparse_autoencoder_conv_forward.1} parent=0 // pred_check_branch
    %620 = sbr.rel (0) target = $region33
  $region32: #{sparse_autoencoder_conv_forward.1} parent=0 // pred_region
    _
  $region33: #{sparse_autoencoder_conv_forward.1} parent=0 // pred_fallthru
    _
  // Predicated region
  $region34: #{sparse_autoencoder_conv_forward.1} parent=0 // pred_check
    _
  $region35: #{sparse_autoencoder_conv_forward.1} parent=0 // pred_check_branch
    %622 = sbr.rel (0) target = $region37
  $region36: #{sparse_autoencoder_conv_forward.1} parent=0 // pred_region
    _
  $region37: #{sparse_autoencoder_conv_forward.1} parent=0 // pred_fallthru
    _
  // Predicated region
  $region38: #{sparse_autoencoder_conv_forward.1} parent=0 // pred_check
    _
  $region39: #{sparse_autoencoder_conv_forward.1} parent=0 // pred_check_branch
    %624 = sbr.rel (0) target = $region41
  $region40: #{sparse_autoencoder_conv_forward.1} parent=0 // pred_region
    _
  $region41: #{sparse_autoencoder_conv_forward.1} parent=0 // pred_fallthru
    _
  // Predicated region
  $region42: #{sparse_autoencoder_conv_forward.1} parent=0 // pred_check
    _
  $region43: #{sparse_autoencoder_conv_forward.1} parent=0 // pred_check_branch
    %626 = sbr.rel (0) target = $region45
  $region44: #{sparse_autoencoder_conv_forward.1} parent=0 // pred_region
    _
  $region45: #{sparse_autoencoder_conv_forward.1} parent=0 // pred_fallthru
    _
  %627 = vsyncmov [#allocation3]
  %s628 = vpop.sfrf %627
  %p629 = scmp.eq.s32.totalorder %s628, 0
  %p630 = pneg %p629
  %632 = shalt.err (%p630)

</llo_original>
